<compile_context>
chip_gen: v7x
topology: tpu7x:2x2x1
jax: 0.10.0
libtpu: 0.0.40
codegen_flags: <defaults>
</compile_context>

<pallas_src>
import math

import jax
import jax.numpy as jnp
from jax.experimental import pallas as pl
from jax.experimental.pallas import tpu as pltpu


def _round_up(x, m):
    return (x + m - 1) // m * m


# ----------------------------------------------------------------------------- #
# Pallas kernel: full LSTM sequence, one timestep per grid iteration.
# ----------------------------------------------------------------------------- #
def encoder_lstm_seq_kernel(
    tok_ref,                    # SMEM (T, Bp) int32   -- scalar prefetch
    emb_ref,                    # VMEM (V, 1, H)       -- resident
    wx_ref, wh_ref, b_ref,      # VMEM (H,4H),(H,4H),(1,4H) -- resident
    h0_ref, c0_ref,             # VMEM (Bp, H)         -- resident
    out_seq_ref,                # VMEM (1, Bp, H)      -- per-timestep output block
    h_out_ref, c_out_ref,       # VMEM (Bp, H)         -- resident carry / final state
    x_buf,                      # VMEM scratch (Bp, H) -- gathered embeddings
):
    t = pl.program_id(0)

    @pl.when(t == 0)
    def _init():
        h_out_ref[...] = h0_ref[...]
        c_out_ref[...] = c0_ref[...]

    Bp, H = x_buf.shape

    # In-kernel embedding gather: token ids are scalars in SMEM, the table is
    # VMEM-resident; each row fetch is a cheap dynamic-index VMEM load.
    for bb in range(Bp):
        tok = tok_ref[t, bb]
        x_buf[pl.ds(bb, 1), :] = emb_ref[tok]          # (1, H)

    x = x_buf[...]          # (Bp, H)
    h = h_out_ref[...]      # (Bp, H)  carry from previous timestep
    c = c_out_ref[...]      # (Bp, H)

    # All four gate pre-activations in two lane-dense MXU matmuls: (Bp, 4H).
    gates = (
        jnp.dot(x, wx_ref[...], preferred_element_type=jnp.float32)
        + jnp.dot(h, wh_ref[...], preferred_element_type=jnp.float32)
        + b_ref[...]
    )

    i_t = jax.nn.sigmoid(gates[:, 0 * H:1 * H])
    f_t = jax.nn.sigmoid(gates[:, 1 * H:2 * H])
    g_t = jnp.tanh(gates[:, 2 * H:3 * H])
    o_t = jax.nn.sigmoid(gates[:, 3 * H:4 * H])

    c_new = f_t * c + i_t * g_t
    h_new = o_t * jnp.tanh(c_new)

    h_out_ref[...] = h_new
    c_out_ref[...] = c_new
    out_seq_ref[0, :, :] = h_new


def encoder_lstm_sequence(tokens, embedding, Wx, Wh, b, h0, c0):
    """Run the encoder over a full token sequence in one pallas_call.

    tokens: (T, B) int32; embedding: (V, H) f32; Wx/Wh: (H, 4H); b: (1, 4H);
    h0/c0: (B, H).  Returns (outputs (T, B, H), h_T (B, H), c_T (B, H)).
    """
    T, B = tokens.shape
    V, H = embedding.shape
    Bp = _round_up(max(B, 1), 8)            # pad batch to f32 sublane multiple

    tokens_p = jnp.zeros((T, Bp), jnp.int32).at[:, :B].set(tokens.astype(jnp.int32))
    h0_p = jnp.zeros((Bp, H), jnp.float32).at[:B].set(h0.astype(jnp.float32))
    c0_p = jnp.zeros((Bp, H), jnp.float32).at[:B].set(c0.astype(jnp.float32))
    emb3 = embedding.astype(jnp.float32).reshape(V, 1, H)

    grid_spec = pltpu.PrefetchScalarGridSpec(
        num_scalar_prefetch=1,              # tokens -> SMEM, passed to index_maps
        grid=(T,),
        in_specs=[
            pl.BlockSpec((V, 1, H), lambda t, tok: (0, 0, 0)),     # embedding (resident)
            pl.BlockSpec((H, 4 * H), lambda t, tok: (0, 0)),       # Wx (resident)
            pl.BlockSpec((H, 4 * H), lambda t, tok: (0, 0)),       # Wh (resident)
            pl.BlockSpec((1, 4 * H), lambda t, tok: (0, 0)),       # b  (resident)
            pl.BlockSpec((Bp, H), lambda t, tok: (0, 0)),          # h0 (resident)
            pl.BlockSpec((Bp, H), lambda t, tok: (0, 0)),          # c0 (resident)
        ],
        out_specs=[
            pl.BlockSpec((1, Bp, H), lambda t, tok: (t, 0, 0)),    # per-step outputs
            pl.BlockSpec((Bp, H), lambda t, tok: (0, 0)),          # final h (carry)
            pl.BlockSpec((Bp, H), lambda t, tok: (0, 0)),          # final c (carry)
        ],
        scratch_shapes=[pltpu.VMEM((Bp, H), jnp.float32)],
    )

    out_seq, h_T, c_T = pl.pallas_call(
        encoder_lstm_seq_kernel,
        out_shape=(
            jax.ShapeDtypeStruct((T, Bp, H), jnp.float32),
            jax.ShapeDtypeStruct((Bp, H), jnp.float32),
            jax.ShapeDtypeStruct((Bp, H), jnp.float32),
        ),
        grid_spec=grid_spec,
        compiler_params=pltpu.CompilerParams(
            dimension_semantics=("arbitrary",)),   # time axis carries h/c
    )(tokens_p, emb3, Wx, Wh, b, h0_p, c0_p)

    return out_seq[:, :B, :], h_T[:B], c_T[:B]


# ----------------------------------------------------------------------------- #
# EncoderRNN wrapper (parameter setup in plain JAX).
# ----------------------------------------------------------------------------- #
class EncoderRNNPallas:
    def __init__(self, input_size, hidden_size, key):
        self.input_size = input_size
        self.hidden_size = hidden_size

        k_emb, k_u, k_v, k_b = jax.random.split(key, 4)
        stdv = 1.0 / math.sqrt(hidden_size)
        H = hidden_size

        # LSTM gate parameters, uniform(-stdv, stdv) as in init_weights(),
        # stored pre-fused in gate order [i, f, g, o] on the lane axis.
        self.Wx = jax.random.uniform(k_u, (H, 4 * H), jnp.float32, -stdv, stdv)
        self.Wh = jax.random.uniform(k_v, (H, 4 * H), jnp.float32, -stdv, stdv)
        self.b = jax.random.uniform(k_b, (1, 4 * H), jnp.float32, -stdv, stdv)

        # nn.Embedding default init: N(0, 1).
        self.embedding = jax.random.normal(k_emb, (input_size, H), jnp.float32)

    def _init_hidden(self, B):
        return (jnp.zeros((B, self.hidden_size), jnp.float32),
                jnp.zeros((B, self.hidden_size), jnp.float32))

    def __call__(self, token_ids, hidden=None):
        """Single timestep, matching EncoderRNN.forward: token_ids (B,) int32."""
        B = token_ids.shape[0]
        h, c = self._init_hidden(B) if hidden is None else hidden
        outs, h_new, c_new = encoder_lstm_sequence(
            token_ids[None, :], self.embedding, self.Wx, self.Wh, self.b, h, c)
        output = outs[0]
        return output, (h_new, c_new)

    def forward_sequence(self, tokens, hidden=None):
        """tokens: (T, B) int32.  Runs all T steps in one pallas_call."""
        T, B = tokens.shape
        h, c = self._init_hidden(B) if hidden is None else hidden
        outs, h_new, c_new = encoder_lstm_sequence(
            tokens, self.embedding, self.Wx, self.Wh, self.b, h, c)
        return outs, (h_new, c_new)


# Pure-JAX reference mirroring the PyTorch math exactly (per-timestep loop).
def reference_forward_sequence(model, tokens, hidden=None):
    T, B = tokens.shape
    H = model.hidden_size
    if hidden is None:
        h = jnp.zeros((B, H), jnp.float32)
        c = jnp.zeros((B, H), jnp.float32)
    else:
        h, c = hidden
    outs = []
    for t in range(T):
        x = jnp.take(model.embedding, tokens[t], axis=0)
        gates = x @ model.Wx + h @ model.Wh + model.b
        i_t = jax.nn.sigmoid(gates[:, 0 * H:1 * H])
        f_t = jax.nn.sigmoid(gates[:, 1 * H:2 * H])
        g_t = jnp.tanh(gates[:, 2 * H:3 * H])
        o_t = jax.nn.sigmoid(gates[:, 3 * H:4 * H])
        c = f_t * c + i_t * g_t
        h = o_t * jnp.tanh(c)
        outs.append(h)
    return jnp.stack(outs, axis=0), (h, c)


if __name__ == "__main__":
    key = jax.random.PRNGKey(0)
    k_model, k_tok = jax.random.split(key)

    vocab_size = 16      # input_size
    hidden_size = 32
    batch = 2
    seq_len = 8

    model = EncoderRNNPallas(vocab_size, hidden_size, k_model)
    tokens = jax.random.randint(k_tok, (seq_len, batch), 0, vocab_size, jnp.int32)

    # Full sequence in one fused kernel call.
    outs, (h_fin, c_fin) = model.forward_sequence(tokens, None)
    outs = jax.block_until_ready(outs)
    h_fin = jax.block_until_ready(h_fin)
    c_fin = jax.block_until_ready(c_fin)

    ref_outs, (ref_h, ref_c) = reference_forward_sequence(model, tokens, None)

    assert outs.shape == (seq_len, batch, hidden_size)
    assert jnp.allclose(outs, ref_outs, atol=1e-4, rtol=1e-4)
    assert jnp.allclose(h_fin, ref_h, atol=1e-4, rtol=1e-4)
    assert jnp.allclose(c_fin, ref_c, atol=1e-4, rtol=1e-4)

    # Single-step API (matches the original module's per-call forward).
    out1, (h1, c1) = model(tokens[0], None)
    out1 = jax.block_until_ready(out1)
    ref1, (rh1, rc1) = reference_forward_sequence(model, tokens[0:1], None)
    assert out1.shape == (batch, hidden_size)
    assert jnp.allclose(out1, ref1[0], atol=1e-4, rtol=1e-4)
    assert jnp.allclose(h1, rh1, atol=1e-4, rtol=1e-4)
    assert jnp.allclose(c1, rc1, atol=1e-4, rtol=1e-4)

    print("KERNEL_OK")
</pallas_src>

<mosaic_0001>
module attributes {stable_mosaic.version = 11 : i64} {
  func.func @encoder_lstm_seq_kernel(%arg0: i32, %arg1: memref<8x8xi32, #tpu.memory_space<smem>>, %arg2: memref<16x1x32xf32, #tpu.memory_space<vmem>>, %arg3: memref<32x128xf32, #tpu.memory_space<vmem>>, %arg4: memref<32x128xf32, #tpu.memory_space<vmem>>, %arg5: memref<1x128xf32, #tpu.memory_space<vmem>>, %arg6: memref<8x32xf32, #tpu.memory_space<vmem>>, %arg7: memref<8x32xf32, #tpu.memory_space<vmem>>, %arg8: memref<1x8x32xf32, #tpu.memory_space<vmem>>, %arg9: memref<8x32xf32, #tpu.memory_space<vmem>>, %arg10: memref<8x32xf32, #tpu.memory_space<vmem>>, %arg11: memref<8x32xf32, #tpu.memory_space<vmem>>) attributes {dimension_semantics = [#tpu.dimension_semantics<arbitrary>], iteration_bounds = array<i64: 8>, scalar_prefetch = 1 : i64, scratch_operands = 1 : i64, tpu.core_type = #tpu.core_type<tc>, window_params = [{pipeline_mode = #tpu.pipeline_mode<synchronous>, transform_indices = @transform_0, window_bounds = array<i64: 16, 1, 32>}, {pipeline_mode = #tpu.pipeline_mode<synchronous>, transform_indices = @transform_1, window_bounds = array<i64: 32, 128>}, {pipeline_mode = #tpu.pipeline_mode<synchronous>, transform_indices = @transform_2, window_bounds = array<i64: 32, 128>}, {pipeline_mode = #tpu.pipeline_mode<synchronous>, transform_indices = @transform_3, window_bounds = array<i64: 1, 128>}, {pipeline_mode = #tpu.pipeline_mode<synchronous>, transform_indices = @transform_4, window_bounds = array<i64: 8, 32>}, {pipeline_mode = #tpu.pipeline_mode<synchronous>, transform_indices = @transform_5, window_bounds = array<i64: 8, 32>}, {transform_indices = @transform_6, window_bounds = array<i64: 1, 8, 32>}, {pipeline_mode = #tpu.pipeline_mode<synchronous>, transform_indices = @transform_7, window_bounds = array<i64: 8, 32>}, {pipeline_mode = #tpu.pipeline_mode<synchronous>, transform_indices = @transform_8, window_bounds = array<i64: 8, 32>}]} {
    %c0_i32 = arith.constant 0 : i32
    %0 = arith.cmpi eq, %arg0, %c0_i32 : i32
    %1 = arith.extui %0 : i1 to i32
    %c0_i32_0 = arith.constant 0 : i32
    %2 = arith.cmpi ne, %1, %c0_i32_0 : i32
    scf.if %2 {
      %c0_56 = arith.constant 0 : index
      %c0_57 = arith.constant 0 : index
      %92 = vector.load %arg6[%c0_56, %c0_57] : memref<8x32xf32, #tpu.memory_space<vmem>>, vector<8x32xf32>
      %c0_58 = arith.constant 0 : index
      %c0_59 = arith.constant 0 : index
      %93 = vector.load %arg9[%c0_58, %c0_59] : memref<8x32xf32, #tpu.memory_space<vmem>>, vector<8x32xf32>
      tpu.vector_store %arg9[%c0_58, %c0_59], %92 {strides = array<i32>} : memref<8x32xf32, #tpu.memory_space<vmem>>, vector<8x32xf32>,
      %c0_60 = arith.constant 0 : index
      %c0_61 = arith.constant 0 : index
      %94 = vector.load %arg7[%c0_60, %c0_61] : memref<8x32xf32, #tpu.memory_space<vmem>>, vector<8x32xf32>
      %c0_62 = arith.constant 0 : index
      %c0_63 = arith.constant 0 : index
      %95 = vector.load %arg10[%c0_62, %c0_63] : memref<8x32xf32, #tpu.memory_space<vmem>>, vector<8x32xf32>
      tpu.vector_store %arg10[%c0_62, %c0_63], %94 {strides = array<i32>} : memref<8x32xf32, #tpu.memory_space<vmem>>, vector<8x32xf32>,
    } else {
    }
    %3 = arith.index_cast %arg0 : i32 to index
    %c0 = arith.constant 0 : index
    %4 = memref.load %arg1[%3, %c0] : memref<8x8xi32, #tpu.memory_space<smem>>
    %5 = arith.index_cast %4 : i32 to index
    %c0_1 = arith.constant 0 : index
    %c0_2 = arith.constant 0 : index
    %6 = vector.load %arg2[%5, %c0_1, %c0_2] : memref<16x1x32xf32, #tpu.memory_space<vmem>>, vector<1x1x32xf32>
    %7 = vector.shape_cast %6 : vector<1x1x32xf32> to vector<1x32xf32>
    %c0_3 = arith.constant 0 : index
    %c0_4 = arith.constant 0 : index
    %8 = vector.load %arg11[%c0_3, %c0_4] : memref<8x32xf32, #tpu.memory_space<vmem>>, vector<1x32xf32>
    tpu.vector_store %arg11[%c0_3, %c0_4], %7 {strides = array<i32>} : memref<8x32xf32, #tpu.memory_space<vmem>>, vector<1x32xf32>,
    %9 = arith.index_cast %arg0 : i32 to index
    %c1 = arith.constant 1 : index
    %10 = memref.load %arg1[%9, %c1] : memref<8x8xi32, #tpu.memory_space<smem>>
    %11 = arith.index_cast %10 : i32 to index
    %c0_5 = arith.constant 0 : index
    %c0_6 = arith.constant 0 : index
    %12 = vector.load %arg2[%11, %c0_5, %c0_6] : memref<16x1x32xf32, #tpu.memory_space<vmem>>, vector<1x1x32xf32>
    %13 = vector.shape_cast %12 : vector<1x1x32xf32> to vector<1x32xf32>
    %c1_7 = arith.constant 1 : index
    %c0_8 = arith.constant 0 : index
    %14 = vector.load %arg11[%c1_7, %c0_8] : memref<8x32xf32, #tpu.memory_space<vmem>>, vector<1x32xf32>
    tpu.vector_store %arg11[%c1_7, %c0_8], %13 {strides = array<i32>} : memref<8x32xf32, #tpu.memory_space<vmem>>, vector<1x32xf32>,
    %15 = arith.index_cast %arg0 : i32 to index
    %c2 = arith.constant 2 : index
    %16 = memref.load %arg1[%15, %c2] : memref<8x8xi32, #tpu.memory_space<smem>>
    %17 = arith.index_cast %16 : i32 to index
    %c0_9 = arith.constant 0 : index
    %c0_10 = arith.constant 0 : index
    %18 = vector.load %arg2[%17, %c0_9, %c0_10] : memref<16x1x32xf32, #tpu.memory_space<vmem>>, vector<1x1x32xf32>
    %19 = vector.shape_cast %18 : vector<1x1x32xf32> to vector<1x32xf32>
    %c2_11 = arith.constant 2 : index
    %c0_12 = arith.constant 0 : index
    %20 = vector.load %arg11[%c2_11, %c0_12] : memref<8x32xf32, #tpu.memory_space<vmem>>, vector<1x32xf32>
    tpu.vector_store %arg11[%c2_11, %c0_12], %19 {strides = array<i32>} : memref<8x32xf32, #tpu.memory_space<vmem>>, vector<1x32xf32>,
    %21 = arith.index_cast %arg0 : i32 to index
    %c3 = arith.constant 3 : index
    %22 = memref.load %arg1[%21, %c3] : memref<8x8xi32, #tpu.memory_space<smem>>
    %23 = arith.index_cast %22 : i32 to index
    %c0_13 = arith.constant 0 : index
    %c0_14 = arith.constant 0 : index
    %24 = vector.load %arg2[%23, %c0_13, %c0_14] : memref<16x1x32xf32, #tpu.memory_space<vmem>>, vector<1x1x32xf32>
    %25 = vector.shape_cast %24 : vector<1x1x32xf32> to vector<1x32xf32>
    %c3_15 = arith.constant 3 : index
    %c0_16 = arith.constant 0 : index
    %26 = vector.load %arg11[%c3_15, %c0_16] : memref<8x32xf32, #tpu.memory_space<vmem>>, vector<1x32xf32>
    tpu.vector_store %arg11[%c3_15, %c0_16], %25 {strides = array<i32>} : memref<8x32xf32, #tpu.memory_space<vmem>>, vector<1x32xf32>,
    %27 = arith.index_cast %arg0 : i32 to index
    %c4 = arith.constant 4 : index
    %28 = memref.load %arg1[%27, %c4] : memref<8x8xi32, #tpu.memory_space<smem>>
    %29 = arith.index_cast %28 : i32 to index
    %c0_17 = arith.constant 0 : index
    %c0_18 = arith.constant 0 : index
    %30 = vector.load %arg2[%29, %c0_17, %c0_18] : memref<16x1x32xf32, #tpu.memory_space<vmem>>, vector<1x1x32xf32>
    %31 = vector.shape_cast %30 : vector<1x1x32xf32> to vector<1x32xf32>
    %c4_19 = arith.constant 4 : index
    %c0_20 = arith.constant 0 : index
    %32 = vector.load %arg11[%c4_19, %c0_20] : memref<8x32xf32, #tpu.memory_space<vmem>>, vector<1x32xf32>
    tpu.vector_store %arg11[%c4_19, %c0_20], %31 {strides = array<i32>} : memref<8x32xf32, #tpu.memory_space<vmem>>, vector<1x32xf32>,
    %33 = arith.index_cast %arg0 : i32 to index
    %c5 = arith.constant 5 : index
    %34 = memref.load %arg1[%33, %c5] : memref<8x8xi32, #tpu.memory_space<smem>>
    %35 = arith.index_cast %34 : i32 to index
    %c0_21 = arith.constant 0 : index
    %c0_22 = arith.constant 0 : index
    %36 = vector.load %arg2[%35, %c0_21, %c0_22] : memref<16x1x32xf32, #tpu.memory_space<vmem>>, vector<1x1x32xf32>
    %37 = vector.shape_cast %36 : vector<1x1x32xf32> to vector<1x32xf32>
    %c5_23 = arith.constant 5 : index
    %c0_24 = arith.constant 0 : index
    %38 = vector.load %arg11[%c5_23, %c0_24] : memref<8x32xf32, #tpu.memory_space<vmem>>, vector<1x32xf32>
    tpu.vector_store %arg11[%c5_23, %c0_24], %37 {strides = array<i32>} : memref<8x32xf32, #tpu.memory_space<vmem>>, vector<1x32xf32>,
    %39 = arith.index_cast %arg0 : i32 to index
    %c6 = arith.constant 6 : index
    %40 = memref.load %arg1[%39, %c6] : memref<8x8xi32, #tpu.memory_space<smem>>
    %41 = arith.index_cast %40 : i32 to index
    %c0_25 = arith.constant 0 : index
    %c0_26 = arith.constant 0 : index
    %42 = vector.load %arg2[%41, %c0_25, %c0_26] : memref<16x1x32xf32, #tpu.memory_space<vmem>>, vector<1x1x32xf32>
    %43 = vector.shape_cast %42 : vector<1x1x32xf32> to vector<1x32xf32>
    %c6_27 = arith.constant 6 : index
    %c0_28 = arith.constant 0 : index
    %44 = vector.load %arg11[%c6_27, %c0_28] : memref<8x32xf32, #tpu.memory_space<vmem>>, vector<1x32xf32>
    tpu.vector_store %arg11[%c6_27, %c0_28], %43 {strides = array<i32>} : memref<8x32xf32, #tpu.memory_space<vmem>>, vector<1x32xf32>,
    %45 = arith.index_cast %arg0 : i32 to index
    %c7 = arith.constant 7 : index
    %46 = memref.load %arg1[%45, %c7] : memref<8x8xi32, #tpu.memory_space<smem>>
    %47 = arith.index_cast %46 : i32 to index
    %c0_29 = arith.constant 0 : index
    %c0_30 = arith.constant 0 : index
    %48 = vector.load %arg2[%47, %c0_29, %c0_30] : memref<16x1x32xf32, #tpu.memory_space<vmem>>, vector<1x1x32xf32>
    %49 = vector.shape_cast %48 : vector<1x1x32xf32> to vector<1x32xf32>
    %c7_31 = arith.constant 7 : index
    %c0_32 = arith.constant 0 : index
    %50 = vector.load %arg11[%c7_31, %c0_32] : memref<8x32xf32, #tpu.memory_space<vmem>>, vector<1x32xf32>
    tpu.vector_store %arg11[%c7_31, %c0_32], %49 {strides = array<i32>} : memref<8x32xf32, #tpu.memory_space<vmem>>, vector<1x32xf32>,
    %c0_33 = arith.constant 0 : index
    %c0_34 = arith.constant 0 : index
    %51 = vector.load %arg11[%c0_33, %c0_34] : memref<8x32xf32, #tpu.memory_space<vmem>>, vector<8x32xf32>
    %c0_35 = arith.constant 0 : index
    %c0_36 = arith.constant 0 : index
    %52 = vector.load %arg9[%c0_35, %c0_36] : memref<8x32xf32, #tpu.memory_space<vmem>>, vector<8x32xf32>
    %c0_37 = arith.constant 0 : index
    %c0_38 = arith.constant 0 : index
    %53 = vector.load %arg10[%c0_37, %c0_38] : memref<8x32xf32, #tpu.memory_space<vmem>>, vector<8x32xf32>
    %c0_39 = arith.constant 0 : index
    %c0_40 = arith.constant 0 : index
    %54 = vector.load %arg3[%c0_39, %c0_40] : memref<32x128xf32, #tpu.memory_space<vmem>>, vector<32x128xf32>
    %cst = arith.constant dense<0.000000e+00> : vector<8x128xf32>
    %55 = tpu.matmul %51, %54, %cst {dimension_numbers = #tpu.dot_dimension_numbers<[1], [0], [0], [1], [0, 0, 1, 1], [], []>} : vector<8x32xf32>, vector<32x128xf32>, vector<8x128xf32> -> vector<8x128xf32>
    %c0_41 = arith.constant 0 : index
    %c0_42 = arith.constant 0 : index
    %56 = vector.load %arg4[%c0_41, %c0_42] : memref<32x128xf32, #tpu.memory_space<vmem>>, vector<32x128xf32>
    %cst_43 = arith.constant dense<0.000000e+00> : vector<8x128xf32>
    %57 = tpu.matmul %52, %56, %cst_43 {dimension_numbers = #tpu.dot_dimension_numbers<[1], [0], [0], [1], [0, 0, 1, 1], [], []>} : vector<8x32xf32>, vector<32x128xf32>, vector<8x128xf32> -> vector<8x128xf32>
    %58 = arith.addf %55, %57 : vector<8x128xf32>
    %c0_44 = arith.constant 0 : index
    %c0_45 = arith.constant 0 : index
    %59 = vector.load %arg5[%c0_44, %c0_45] : memref<1x128xf32, #tpu.memory_space<vmem>>, vector<1x128xf32>
    %60 = vector.broadcast %59 : vector<1x128xf32> to vector<8x128xf32>
    %61 = arith.addf %58, %60 : vector<8x128xf32>
    %62 = vector.extract_strided_slice %61 {offsets = [0, 0], sizes = [8, 32], strides = [1, 1]} : vector<8x128xf32> to vector<8x32xf32>
    %63 = arith.negf %62 : vector<8x32xf32>
    %64 = math.exp %63 : vector<8x32xf32>
    %cst_46 = arith.constant 1.000000e+00 : f32
    %65 = vector.broadcast %cst_46 : f32 to vector<8x32xf32>
    %66 = arith.addf %65, %64 : vector<8x32xf32>
    %67 = arith.divf %65, %66 : vector<8x32xf32>
    %68 = vector.extract_strided_slice %61 {offsets = [0, 32], sizes = [8, 32], strides = [1, 1]} : vector<8x128xf32> to vector<8x32xf32>
    %69 = arith.negf %68 : vector<8x32xf32>
    %70 = math.exp %69 : vector<8x32xf32>
    %cst_47 = arith.constant 1.000000e+00 : f32
    %71 = vector.broadcast %cst_47 : f32 to vector<8x32xf32>
    %72 = arith.addf %71, %70 : vector<8x32xf32>
    %73 = arith.divf %71, %72 : vector<8x32xf32>
    %74 = vector.extract_strided_slice %61 {offsets = [0, 64], sizes = [8, 32], strides = [1, 1]} : vector<8x128xf32> to vector<8x32xf32>
    %75 = math.tanh %74 : vector<8x32xf32>
    %76 = vector.extract_strided_slice %61 {offsets = [0, 96], sizes = [8, 32], strides = [1, 1]} : vector<8x128xf32> to vector<8x32xf32>
    %77 = arith.negf %76 : vector<8x32xf32>
    %78 = math.exp %77 : vector<8x32xf32>
    %cst_48 = arith.constant 1.000000e+00 : f32
    %79 = vector.broadcast %cst_48 : f32 to vector<8x32xf32>
    %80 = arith.addf %79, %78 : vector<8x32xf32>
    %81 = arith.divf %79, %80 : vector<8x32xf32>
    %82 = arith.mulf %73, %53 : vector<8x32xf32>
    %83 = arith.mulf %67, %75 : vector<8x32xf32>
    %84 = arith.addf %82, %83 : vector<8x32xf32>
    %85 = math.tanh %84 : vector<8x32xf32>
    %86 = arith.mulf %81, %85 : vector<8x32xf32>
    %c0_49 = arith.constant 0 : index
    %c0_50 = arith.constant 0 : index
    %87 = vector.load %arg9[%c0_49, %c0_50] : memref<8x32xf32, #tpu.memory_space<vmem>>, vector<8x32xf32>
    tpu.vector_store %arg9[%c0_49, %c0_50], %86 {strides = array<i32>} : memref<8x32xf32, #tpu.memory_space<vmem>>, vector<8x32xf32>,
    %c0_51 = arith.constant 0 : index
    %c0_52 = arith.constant 0 : index
    %88 = vector.load %arg10[%c0_51, %c0_52] : memref<8x32xf32, #tpu.memory_space<vmem>>, vector<8x32xf32>
    tpu.vector_store %arg10[%c0_51, %c0_52], %84 {strides = array<i32>} : memref<8x32xf32, #tpu.memory_space<vmem>>, vector<8x32xf32>,
    %c0_53 = arith.constant 0 : index
    %c0_54 = arith.constant 0 : index
    %c0_55 = arith.constant 0 : index
    %89 = vector.load %arg8[%c0_53, %c0_54, %c0_55] : memref<1x8x32xf32, #tpu.memory_space<vmem>>, vector<1x8x32xf32>
    %90 = vector.shape_cast %89 : vector<1x8x32xf32> to vector<8x32xf32>
    %91 = vector.shape_cast %86 : vector<8x32xf32> to vector<1x8x32xf32>
    tpu.vector_store %arg8[%c0_53, %c0_54, %c0_55], %91 {strides = array<i32>} : memref<1x8x32xf32, #tpu.memory_space<vmem>>, vector<1x8x32xf32>,
    return
  }
  func.func @transform_0(%arg0: i32, %arg1: memref<8x8xi32, #tpu.memory_space<smem>>) -> (i32, i32, i32) {
    %c0_i32 = arith.constant 0 : i32
    %c0_i32_0 = arith.constant 0 : i32
    %c0_i32_1 = arith.constant 0 : i32
    %c0_i32_2 = arith.constant 0 : i32
    return %c0_i32, %c0_i32_0, %c0_i32_1 : i32, i32, i32
  }
  func.func @transform_1(%arg0: i32, %arg1: memref<8x8xi32, #tpu.memory_space<smem>>) -> (i32, i32) {
    %c0_i32 = arith.constant 0 : i32
    %c0_i32_0 = arith.constant 0 : i32
    %c0_i32_1 = arith.constant 0 : i32
    return %c0_i32, %c0_i32_0 : i32, i32
  }
  func.func @transform_2(%arg0: i32, %arg1: memref<8x8xi32, #tpu.memory_space<smem>>) -> (i32, i32) {
    %c0_i32 = arith.constant 0 : i32
    %c0_i32_0 = arith.constant 0 : i32
    %c0_i32_1 = arith.constant 0 : i32
    return %c0_i32, %c0_i32_0 : i32, i32
  }
  func.func @transform_3(%arg0: i32, %arg1: memref<8x8xi32, #tpu.memory_space<smem>>) -> (i32, i32) {
    %c0_i32 = arith.constant 0 : i32
    %c0_i32_0 = arith.constant 0 : i32
    %c0_i32_1 = arith.constant 0 : i32
    return %c0_i32, %c0_i32_0 : i32, i32
  }
  func.func @transform_4(%arg0: i32, %arg1: memref<8x8xi32, #tpu.memory_space<smem>>) -> (i32, i32) {
    %c0_i32 = arith.constant 0 : i32
    %c0_i32_0 = arith.constant 0 : i32
    %c0_i32_1 = arith.constant 0 : i32
    return %c0_i32, %c0_i32_0 : i32, i32
  }
  func.func @transform_5(%arg0: i32, %arg1: memref<8x8xi32, #tpu.memory_space<smem>>) -> (i32, i32) {
    %c0_i32 = arith.constant 0 : i32
    %c0_i32_0 = arith.constant 0 : i32
    %c0_i32_1 = arith.constant 0 : i32
    return %c0_i32, %c0_i32_0 : i32, i32
  }
  func.func @transform_6(%arg0: i32, %arg1: memref<8x8xi32, #tpu.memory_space<smem>>) -> (i32, i32, i32) {
    %c0_i32 = arith.constant 0 : i32
    %c0_i32_0 = arith.constant 0 : i32
    %c0_i32_1 = arith.constant 0 : i32
    return %arg0, %c0_i32, %c0_i32_0 : i32, i32, i32
  }
  func.func @transform_7(%arg0: i32, %arg1: memref<8x8xi32, #tpu.memory_space<smem>>) -> (i32, i32) {
    %c0_i32 = arith.constant 0 : i32
    %c0_i32_0 = arith.constant 0 : i32
    %c0_i32_1 = arith.constant 0 : i32
    return %c0_i32, %c0_i32_0 : i32, i32
  }
  func.func @transform_8(%arg0: i32, %arg1: memref<8x8xi32, #tpu.memory_space<smem>>) -> (i32, i32) {
    %c0_i32 = arith.constant 0 : i32
    %c0_i32_0 = arith.constant 0 : i32
    %c0_i32_1 = arith.constant 0 : i32
    return %c0_i32, %c0_i32_0 : i32, i32
  }
}

</mosaic_0001>

<llo_original>
// kernel: tpu_custom_call.1
$region0: #{tpu_custom_call.1}
  #allocation0 [shape = 'u32[]', space=smem, size = 0x4, offset = 0x4, fixed_abs, tag = 'smem constant byte address 0x4 - core index']
  #allocation1 [shape = 'u32[144,128]{1,0:T(1,128)}', space=vmem, size = 0x12000, scoped, tag = 'internal scratch']
  #allocation2 [shape = 'f32[8,32]{1,0:T(8,128)}', space=vmem, size = 0x1000, scoped, tag = 'scratch operand']
  #allocation3 [shape = 's32[1]{0}', space=sflag, size = 0x4, scoped, tag = 'scoped memory for tpu_custom_call.1']
  #allocation4 [shape = 'u8[4096]{0}', space=smem, size = 0x1000, scoped, tag = 'prefetched SMEM operand 0']
  %s0 = inlined_call_operand.hbm [shape: s32[8,8], index: 0, kind: input, shape index: {}]
  %s1 = inlined_call_operand.hbm [shape: f32[16,1,32], index: 1, kind: input, shape index: {}]
  %s2 = inlined_call_operand.hbm [shape: f32[32,128], index: 2, kind: input, shape index: {}]
  %s3 = inlined_call_operand.hbm [shape: f32[32,128], index: 3, kind: input, shape index: {}]
  %s4 = inlined_call_operand.vmem [shape: f32[1,128], index: 4, kind: input, shape index: {}]
  %s5 = inlined_call_operand.vmem [shape: f32[8,32], index: 5, kind: input, shape index: {}]
  %s6 = inlined_call_operand.vmem [shape: f32[8,32], index: 6, kind: input, shape index: {}]
  %s7 = inlined_call_operand.hbm [shape: f32[8,8,32], index: 7, kind: output, shape index: {0}]
  %s8 = inlined_call_operand.hbm [shape: f32[8,32], index: 8, kind: output, shape index: {1}]
  %s9 = inlined_call_operand.hbm [shape: f32[8,32], index: 9, kind: output, shape index: {2}]
  %10 = xla_tuple %s7, %s8, %s9
  %s11 = sld [smem:[#allocation0]]
  $region89: #{tpu_custom_call.1} parent=0
    _
  %s13 = ssub.s32 1, %s11
  %s14 = scalar_select 0, %s13, %s11
  %16 = dma.hbm_to_smem %s0, 128, [#allocation4], [#allocation3]
  %17 = dma.done [#allocation3], 128
  %18 = sfence
  $region1: #{tpu_custom_call.1} parent=0
    #allocation5 [shape = 'u8[8192]{0}', space=vmem, size = 0x2000, scoped, tag = 'input window, operand 1, single buffered']
    #allocation6 [shape = 's32[2]{0}', space=sflag, size = 0x8, scoped, tag = 'scoped memory for tpu_custom_call.1']
    #allocation7 [shape = 's32[2]{0}', space=sflag, size = 0x8, scoped, tag = 'scoped memory for tpu_custom_call.1']
    #allocation8 [shape = 'u8[16384]{0}', space=vmem, size = 0x4000, scoped, tag = 'input window, operand 2, single buffered']
    #allocation9 [shape = 's32[1]{0}', space=sflag, size = 0x4, scoped, tag = 'scoped memory for tpu_custom_call.1']
    #allocation10 [shape = 'u8[16384]{0}', space=vmem, size = 0x4000, scoped, tag = 'input window, operand 3, single buffered']
    #allocation11 [shape = 'u8[8192]{0}', space=vmem, size = 0x2000, scoped, tag = 'output window, operand 0']
    #allocation12 [shape = 'u8[4096]{0}', space=vmem, size = 0x1000, scoped, tag = 'output window, operand 1, single buffered']
    #allocation13 [shape = 's32[1]{0}', space=sflag, size = 0x4, scoped, tag = 'scoped memory for tpu_custom_call.1']
    #allocation14 [shape = 'u8[4096]{0}', space=vmem, size = 0x1000, scoped, tag = 'output window, operand 2, single buffered']
    %19 = vsyncpa [#allocation6], 0
    %20 = vsyncpa [#allocation9], 0
    %21 = vsyncpa [#allocation7], 0
    %s22 = scalar_lea.sflag [#allocation7], 1
    %23 = vsyncpa %s22, 0
    %24 = vsyncpa [#allocation13], 0
    loop: start=0, step=1, limit=10
    $region2: #{tpu_custom_call.1} parent=1 // loop_pre_header
      _
    $region3: #{tpu_custom_call.1} parent=1 // loop_header
      %s26 = sphi 0, %s30
      %p27 = scmp.ge.s32.totalorder %s26, 10
      %s34 = sphi 0, %s34
      %s36 = sphi 0, %s34
      %s37 = sphi 0, %s36
      %s51 = sphi 0, %s37
      %s55 = sphi 0, %s55
      %s57 = sphi 0, %s55
      %s58 = sphi 0, %s57
      %s72 = sphi 0, %s58
      %s76 = sphi 0, %s76
      %s78 = sphi 0, %s76
      %s79 = sphi 0, %s78
      %s93 = sphi 0, %s79
      %s97 = sphi 0, %s97
      %s99 = sphi 0, %s97
      %s100 = sphi 0, %s99
      %s114 = sphi 0, %s100
      %s118 = sphi 0, %s118
      %s120 = sphi 0, %s118
      %s121 = sphi 0, %s120
      %s135 = sphi 0, %s121
      %s139 = sphi 0, %s139
      %s141 = sphi 0, %s139
      %s142 = sphi 0, %s141
      %s156 = sphi 0, %s142
      %s162 = sphi 0, %s164
      %s165 = sphi 0, %s162
      %s166 = sphi 0, %s165
      %s182 = sphi 0, %s166
      %s186 = sphi 0, %s186
      %s188 = sphi 0, %s186
      %s189 = sphi 0, %s188
      %s203 = sphi 0, %s189
      %s207 = sphi 0, %s207
      %s209 = sphi 0, %s207
      %s210 = sphi 0, %s209
      %s224 = sphi 0, %s210
    $region4: #{tpu_custom_call.1} parent=1 // loop_header_branch
      %29 = sbr.rel (%p27) target = $region8
    $region5: #{tpu_custom_call.1} parent=1 // loop_body
      %s31 = ssub.s32 %s26, 1
      %s32 = ssub.s32 %s26, 2
      %s33 = sadd.s32 %s26, 1
      %s35 = sadd.s32 %s34, 1
      %p38 = scmp.eq.s32.totalorder %s26, 7
      %p39 = scmp.ne.s32.totalorder %s34, %s36
      %p40 = scmp.eq.s32.totalorder %s26, 0
      %p41 = por %p39, %p40
      %p42 = scmp.ne.s32.totalorder %s34, %s36
      %p43 = scmp.eq.s32.totalorder %s31, 7
      %p44 = por %p42, %p43
      %p45 = scmp.ne.s32.totalorder %s36, %s37
      %p46 = scmp.eq.s32.totalorder %s31, 0
      %p47 = por %p45, %p46
      %p48 = scmp.ne.s32.totalorder %s36, %s37
      %p49 = scmp.eq.s32.totalorder %s32, 7
      %p50 = por %p48, %p49
      %p52 = scmp.ne.s32.totalorder %s37, %s51
      %p53 = scmp.eq.s32.totalorder %s32, 0
      %p54 = por %p52, %p53
      %s56 = sadd.s32 %s55, 1
      %p59 = scmp.eq.s32.totalorder %s26, 7
      %p60 = scmp.ne.s32.totalorder %s55, %s57
      %p61 = scmp.eq.s32.totalorder %s26, 0
      %p62 = por %p60, %p61
      %p63 = scmp.ne.s32.totalorder %s55, %s57
      %p64 = scmp.eq.s32.totalorder %s31, 7
      %p65 = por %p63, %p64
      %p66 = scmp.ne.s32.totalorder %s57, %s58
      %p67 = scmp.eq.s32.totalorder %s31, 0
      %p68 = por %p66, %p67
      %p69 = scmp.ne.s32.totalorder %s57, %s58
      %p70 = scmp.eq.s32.totalorder %s32, 7
      %p71 = por %p69, %p70
      %p73 = scmp.ne.s32.totalorder %s58, %s72
      %p74 = scmp.eq.s32.totalorder %s32, 0
      %p75 = por %p73, %p74
      %s77 = sadd.s32 %s76, 1
      %p80 = scmp.eq.s32.totalorder %s26, 7
      %p81 = scmp.ne.s32.totalorder %s76, %s78
      %p82 = scmp.eq.s32.totalorder %s26, 0
      %p83 = por %p81, %p82
      %p84 = scmp.ne.s32.totalorder %s76, %s78
      %p85 = scmp.eq.s32.totalorder %s31, 7
      %p86 = por %p84, %p85
      %p87 = scmp.ne.s32.totalorder %s78, %s79
      %p88 = scmp.eq.s32.totalorder %s31, 0
      %p89 = por %p87, %p88
      %p90 = scmp.ne.s32.totalorder %s78, %s79
      %p91 = scmp.eq.s32.totalorder %s32, 7
      %p92 = por %p90, %p91
      %p94 = scmp.ne.s32.totalorder %s79, %s93
      %p95 = scmp.eq.s32.totalorder %s32, 0
      %p96 = por %p94, %p95
      %s98 = sadd.s32 %s97, 1
      %p101 = scmp.eq.s32.totalorder %s26, 7
      %p102 = scmp.ne.s32.totalorder %s97, %s99
      %p103 = scmp.eq.s32.totalorder %s26, 0
      %p104 = por %p102, %p103
      %p105 = scmp.ne.s32.totalorder %s97, %s99
      %p106 = scmp.eq.s32.totalorder %s31, 7
      %p107 = por %p105, %p106
      %p108 = scmp.ne.s32.totalorder %s99, %s100
      %p109 = scmp.eq.s32.totalorder %s31, 0
      %p110 = por %p108, %p109
      %p111 = scmp.ne.s32.totalorder %s99, %s100
      %p112 = scmp.eq.s32.totalorder %s32, 7
      %p113 = por %p111, %p112
      %p115 = scmp.ne.s32.totalorder %s100, %s114
      %p116 = scmp.eq.s32.totalorder %s32, 0
      %p117 = por %p115, %p116
      %s119 = sadd.s32 %s118, 1
      %p122 = scmp.eq.s32.totalorder %s26, 7
      %p123 = scmp.ne.s32.totalorder %s118, %s120
      %p124 = scmp.eq.s32.totalorder %s26, 0
      %p125 = por %p123, %p124
      %p126 = scmp.ne.s32.totalorder %s118, %s120
      %p127 = scmp.eq.s32.totalorder %s31, 7
      %p128 = por %p126, %p127
      %p129 = scmp.ne.s32.totalorder %s120, %s121
      %p130 = scmp.eq.s32.totalorder %s31, 0
      %p131 = por %p129, %p130
      %p132 = scmp.ne.s32.totalorder %s120, %s121
      %p133 = scmp.eq.s32.totalorder %s32, 7
      %p134 = por %p132, %p133
      %p136 = scmp.ne.s32.totalorder %s121, %s135
      %p137 = scmp.eq.s32.totalorder %s32, 0
      %p138 = por %p136, %p137
      %s140 = sadd.s32 %s139, 1
      %p143 = scmp.eq.s32.totalorder %s26, 7
      %p144 = scmp.ne.s32.totalorder %s139, %s141
      %p145 = scmp.eq.s32.totalorder %s26, 0
      %p146 = por %p144, %p145
      %p147 = scmp.ne.s32.totalorder %s139, %s141
      %p148 = scmp.eq.s32.totalorder %s31, 7
      %p149 = por %p147, %p148
      %p150 = scmp.ne.s32.totalorder %s141, %s142
      %p151 = scmp.eq.s32.totalorder %s31, 0
      %p152 = por %p150, %p151
      %p153 = scmp.ne.s32.totalorder %s141, %s142
      %p154 = scmp.eq.s32.totalorder %s32, 7
      %p155 = por %p153, %p154
      %p157 = scmp.ne.s32.totalorder %s142, %s156
      %p158 = scmp.eq.s32.totalorder %s32, 0
      %p159 = por %p157, %p158
      %s160 = ssub.s32 %s26, %s33
      %p161 = scmp.eq.s32.totalorder %s160, 0
      %s163 = sadd.s32 %s162, 1
      %s164 = scalar_select %p161, %s162, %s163
      %p167 = pneg %p161
      %p168 = scmp.eq.s32.totalorder %s26, 7
      %p169 = por %p167, %p168
      %p170 = scmp.ne.s32.totalorder %s162, %s165
      %p171 = scmp.eq.s32.totalorder %s26, 0
      %p172 = por %p170, %p171
      %p173 = scmp.ne.s32.totalorder %s162, %s165
      %p174 = scmp.eq.s32.totalorder %s31, 7
      %p175 = por %p173, %p174
      %p176 = scmp.ne.s32.totalorder %s165, %s166
      %p177 = scmp.eq.s32.totalorder %s31, 0
      %p178 = por %p176, %p177
      %p179 = scmp.ne.s32.totalorder %s165, %s166
      %p180 = scmp.eq.s32.totalorder %s32, 7
      %p181 = por %p179, %p180
      %p183 = scmp.ne.s32.totalorder %s166, %s182
      %p184 = scmp.eq.s32.totalorder %s32, 0
      %p185 = por %p183, %p184
      %s187 = sadd.s32 %s186, 1
      %p190 = scmp.eq.s32.totalorder %s26, 7
      %p191 = scmp.ne.s32.totalorder %s186, %s188
      %p192 = scmp.eq.s32.totalorder %s26, 0
      %p193 = por %p191, %p192
      %p194 = scmp.ne.s32.totalorder %s186, %s188
      %p195 = scmp.eq.s32.totalorder %s31, 7
      %p196 = por %p194, %p195
      %p197 = scmp.ne.s32.totalorder %s188, %s189
      %p198 = scmp.eq.s32.totalorder %s31, 0
      %p199 = por %p197, %p198
      %p200 = scmp.ne.s32.totalorder %s188, %s189
      %p201 = scmp.eq.s32.totalorder %s32, 7
      %p202 = por %p200, %p201
      %p204 = scmp.ne.s32.totalorder %s189, %s203
      %p205 = scmp.eq.s32.totalorder %s32, 0
      %p206 = por %p204, %p205
      %s208 = sadd.s32 %s207, 1
      %p211 = scmp.eq.s32.totalorder %s26, 7
      %p212 = scmp.ne.s32.totalorder %s207, %s209
      %p213 = scmp.eq.s32.totalorder %s26, 0
      %p214 = por %p212, %p213
      %p215 = scmp.ne.s32.totalorder %s207, %s209
      %p216 = scmp.eq.s32.totalorder %s31, 7
      %p217 = por %p215, %p216
      %p218 = scmp.ne.s32.totalorder %s209, %s210
      %p219 = scmp.eq.s32.totalorder %s31, 0
      %p220 = por %p218, %p219
      %p221 = scmp.ne.s32.totalorder %s209, %s210
      %p222 = scmp.eq.s32.totalorder %s32, 7
      %p223 = por %p221, %p222
      %p225 = scmp.ne.s32.totalorder %s210, %s224
      %p226 = scmp.eq.s32.totalorder %s32, 0
      %p227 = por %p225, %p226
      %p228 = scmp.le.s32.totalorder 1, %s26
      %p229 = scmp.lt.s32.totalorder %s26, 9
      %p230 = pnand %p228, %p229
      %p231 = pneg %p230
      // Predicated region
      $region9: #{tpu_custom_call.1} parent=5 // pred_check
        _
      $region10: #{tpu_custom_call.1} parent=5 // pred_check_branch
        %233 = sbr.rel (%p230) target = $region12
      $region11: #{tpu_custom_call.1} parent=5 // pred_region
        %s234 = ssub.s32 %s26, 1
        // Predicated region
        $region13: #{tpu_custom_call.1} parent=11 // pred_check
          %p235 = pneg %p47
        $region14: #{tpu_custom_call.1} parent=11 // pred_check_branch
          %237 = sbr.rel (%p235) target = $region16
        $region15: #{tpu_custom_call.1} parent=11 // pred_region
          %s239 = ssub.s32 256, 256
          %240 = vsyncadd [#allocation6], %s239
          %s241 = sshll.u32 [#allocation5], 4
          %s242 = int_to_ptr.vmem [resolvable:$true] %s241
          %247 = dma.hbm_to_vmem [thread:$0]  %s1, 256, %s242, [#allocation6], 16, 16, 1
        $region16: #{tpu_custom_call.1} parent=11 // pred_fallthru
          _
        // Predicated region
        $region17: #{tpu_custom_call.1} parent=11 // pred_check
          %p248 = pneg %p68
        $region18: #{tpu_custom_call.1} parent=11 // pred_check_branch
          %250 = sbr.rel (%p248) target = $region20
        $region19: #{tpu_custom_call.1} parent=11 // pred_region
          %s252 = ssub.s32 512, 512
          %253 = vsyncadd [#allocation9], %s252
          %s254 = sshll.u32 [#allocation8], 4
          %s255 = int_to_ptr.vmem [resolvable:$true] %s254
          %260 = dma.hbm_to_vmem [thread:$0]  %s2, 512, %s255, [#allocation9], 128, 128, 8
        $region20: #{tpu_custom_call.1} parent=11 // pred_fallthru
          _
        // Predicated region
        $region21: #{tpu_custom_call.1} parent=11 // pred_check
          %p261 = pneg %p89
        $region22: #{tpu_custom_call.1} parent=11 // pred_check_branch
          %263 = sbr.rel (%p261) target = $region24
        $region23: #{tpu_custom_call.1} parent=11 // pred_region
          %s265 = ssub.s32 512, 512
          %266 = vsyncadd [#allocation9], %s265
          %s267 = sshll.u32 [#allocation10], 4
          %s268 = int_to_ptr.vmem [resolvable:$true] %s267
          %273 = dma.hbm_to_vmem [thread:$0]  %s3, 512, %s268, [#allocation9], 128, 128, 8
        $region24: #{tpu_custom_call.1} parent=11 // pred_fallthru
          _
        // Predicated region
        $region25: #{tpu_custom_call.1} parent=11 // pred_check
          %p274 = pneg %p110
        $region26: #{tpu_custom_call.1} parent=11 // pred_check_branch
          %276 = sbr.rel (%p274) target = $region28
        $region27: #{tpu_custom_call.1} parent=11 // pred_region
          _
        $region28: #{tpu_custom_call.1} parent=11 // pred_fallthru
          _
        // Predicated region
        $region29: #{tpu_custom_call.1} parent=11 // pred_check
          %p277 = pneg %p131
        $region30: #{tpu_custom_call.1} parent=11 // pred_check_branch
          %279 = sbr.rel (%p277) target = $region32
        $region31: #{tpu_custom_call.1} parent=11 // pred_region
          _
        $region32: #{tpu_custom_call.1} parent=11 // pred_fallthru
          _
        // Predicated region
        $region33: #{tpu_custom_call.1} parent=11 // pred_check
          %p280 = pneg %p152
        $region34: #{tpu_custom_call.1} parent=11 // pred_check_branch
          %282 = sbr.rel (%p280) target = $region36
        $region35: #{tpu_custom_call.1} parent=11 // pred_region
          _
        $region36: #{tpu_custom_call.1} parent=11 // pred_fallthru
          _
      $region12: #{tpu_custom_call.1} parent=5 // pred_fallthru
        _
      %p283 = scmp.lt.s32.totalorder %s26, 8
      // Predicated region
      $region37: #{tpu_custom_call.1} parent=5 // pred_check
        %p284 = pneg %p283
      $region38: #{tpu_custom_call.1} parent=5 // pred_check_branch
        %286 = sbr.rel (%p284) target = $region40
      $region39: #{tpu_custom_call.1} parent=5 // pred_region
        _
      $region40: #{tpu_custom_call.1} parent=5 // pred_fallthru
        _
      %p287 = scmp.le.s32.totalorder 1, %s26
      %p288 = scmp.lt.s32.totalorder %s26, 9
      %p289 = pnand %p287, %p288
      %p290 = pneg %p289
      // Predicated region
      $region41: #{tpu_custom_call.1} parent=5 // pred_check
        _
      $region42: #{tpu_custom_call.1} parent=5 // pred_check_branch
        %292 = sbr.rel (%p289) target = $region44
      $region43: #{tpu_custom_call.1} parent=5 // pred_region
        %s293 = ssub.s32 %s26, 1
        // Predicated region
        $region45: #{tpu_custom_call.1} parent=43 // pred_check
          %p294 = pneg %p47
        $region46: #{tpu_custom_call.1} parent=43 // pred_check_branch
          %296 = sbr.rel (%p294) target = $region48
        $region47: #{tpu_custom_call.1} parent=43 // pred_region
          %297 = dma.done [#allocation6], 256
        $region48: #{tpu_custom_call.1} parent=43 // pred_fallthru
          _
        // Predicated region
        $region49: #{tpu_custom_call.1} parent=43 // pred_check
          %p298 = pneg %p68
        $region50: #{tpu_custom_call.1} parent=43 // pred_check_branch
          %300 = sbr.rel (%p298) target = $region52
        $region51: #{tpu_custom_call.1} parent=43 // pred_region
          %301 = dma.done [#allocation9], 512
        $region52: #{tpu_custom_call.1} parent=43 // pred_fallthru
          _
        // Predicated region
        $region53: #{tpu_custom_call.1} parent=43 // pred_check
          %p302 = pneg %p89
        $region54: #{tpu_custom_call.1} parent=43 // pred_check_branch
          %304 = sbr.rel (%p302) target = $region56
        $region55: #{tpu_custom_call.1} parent=43 // pred_region
          %305 = dma.done [#allocation9], 512
        $region56: #{tpu_custom_call.1} parent=43 // pred_fallthru
          _
        %p306 = pneg %p47
        %p307 = pneg %p44
        %p308 = pneg %p68
        %p309 = pneg %p65
        %p310 = pneg %p89
        %p311 = pneg %p86
        %p312 = pneg %p110
        %p313 = pneg %p107
        %p314 = pneg %p131
        %p315 = pneg %p128
        %p316 = pneg %p152
        %p317 = pneg %p149
        %p318 = pneg %p178
        %p319 = pneg %p175
        %s320 = sand.u32 %s165, 1
        %s321 = scalar_lea.sflag [#allocation7], %s320
        %s322 = sand.u32 %s165, 1
        %s323 = smul.addr %s322, 8
        %s324 = scalar_lea.vmem [#allocation11], %s323
        %p325 = pneg %p199
        %p326 = pneg %p196
        %p327 = pneg %p220
        %p328 = pneg %p217
        %p329 = scmp.eq.s32.totalorder %s31, 0
        // Predicated region
        $region57: #{tpu_custom_call.1} parent=43 // pred_check
          %p330 = pneg %p329
        $region58: #{tpu_custom_call.1} parent=43 // pred_check_branch
          %332 = sbr.rel (%p330) target = $region60
        $region59: #{tpu_custom_call.1} parent=43 // pred_region
          %v333 = vld [vmem:[%s5] sm:$0xff]
          %vm334 = vcmask 261120
          %335 = vst.msk [vmem:[#allocation12] sm:$0xff] %vm334, %v333
          %v336 = vld [vmem:[%s6] sm:$0xff]
          %337 = vst.msk [vmem:[#allocation14] sm:$0xff] %vm334, %v336
        $region60: #{tpu_custom_call.1} parent=43 // pred_fallthru
          _
        %s338 = smul.u32 %s31, 128
        %s339 = sld [smem:[#allocation4 + %s338]]
        %s340 = scalar_lea.vmem [#allocation5], %s339
        %v341 = vld [vmem:[%s340] sm:$0x1]
        %vm342 = vcmask 253952
        %343 = vst.msk [vmem:[#allocation2] sm:$0x1] %vm342, %v341
        %s344 = sadd.s32 %s338, 1
        %s345 = sld [smem:[#allocation4 + %s344]]
        %s346 = scalar_lea.vmem [#allocation5], %s345
        %v347 = vld [vmem:[%s346] sm:$0x1]
        %348 = vst.msk [vmem:[#allocation2 + $0x1] sm:$0x1] %vm342, %v347
        %s349 = sadd.s32 %s338, 2
        %s350 = sld [smem:[#allocation4 + %s349]]
        %s351 = scalar_lea.vmem [#allocation5], %s350
        %v352 = vld [vmem:[%s351] sm:$0x1]
        %353 = vst.msk [vmem:[#allocation2 + $0x2] sm:$0x1] %vm342, %v352
        %s354 = sadd.s32 %s338, 3
        %s355 = sld [smem:[#allocation4 + %s354]]
        %s356 = scalar_lea.vmem [#allocation5], %s355
        %v357 = vld [vmem:[%s356] sm:$0x1]
        %358 = vst.msk [vmem:[#allocation2 + $0x3] sm:$0x1] %vm342, %v357
        %s359 = sadd.s32 %s338, 4
        %s360 = sld [smem:[#allocation4 + %s359]]
        %s361 = scalar_lea.vmem [#allocation5], %s360
        %v362 = vld [vmem:[%s361] sm:$0x1]
        %363 = vst.msk [vmem:[#allocation2 + $0x4] sm:$0x1] %vm342, %v362
        %s364 = sadd.s32 %s338, 5
        %s365 = sld [smem:[#allocation4 + %s364]]
        %s366 = scalar_lea.vmem [#allocation5], %s365
        %v367 = vld [vmem:[%s366] sm:$0x1]
        %368 = vst.msk [vmem:[#allocation2 + $0x5] sm:$0x1] %vm342, %v367
        %s369 = sadd.s32 %s338, 6
        %s370 = sld [smem:[#allocation4 + %s369]]
        %s371 = scalar_lea.vmem [#allocation5], %s370
        %v372 = vld [vmem:[%s371] sm:$0x1]
        %373 = vst.msk [vmem:[#allocation2 + $0x6] sm:$0x1] %vm342, %v372
        %s374 = sadd.s32 %s338, 7
        %s375 = sld [smem:[#allocation4 + %s374]]
        %s376 = scalar_lea.vmem [#allocation5], %s375
        %v377 = vld [vmem:[%s376] sm:$0x1]
        %378 = vst.msk [vmem:[#allocation2 + $0x7] sm:$0x1] %vm342, %v377
        %v379 = vld [vmem:[#allocation2] sm:$0xff]
        %v380 = vld [vmem:[#allocation12] sm:$0xff]
        %v381 = vld [vmem:[#allocation14] sm:$0xff]
        %v382 = vld [vmem:[#allocation8] sm:$0xff]
        %v383 = vld [vmem:[#allocation8 + $0x8] sm:$0xff]
        %v384 = vld [vmem:[#allocation8 + $0x10] sm:$0xff]
        %v385 = vld [vmem:[#allocation8 + $0x18] sm:$0xff]
        %v386 = vld [vmem:[#allocation10] sm:$0xff]
        %v387 = vld [vmem:[#allocation10 + $0x8] sm:$0xff]
        %v388 = vld [vmem:[#allocation10 + $0x10] sm:$0xff]
        %v389 = vld [vmem:[#allocation10 + $0x18] sm:$0xff]
        %vm390 = vcmask 261120
        %v392 = vsel %vm390, %v380, 0
        %394 = vmatprep.subr.mxu0 0.0
        %395 = vmatpush1.msra.mxu0 %v386
        %396 = vmatprep.subr.mxu0 0.0
        %397 = vmatpush1.msra.mxu0 %v387
        %398 = vmatprep.subr.mxu0 0.0
        %399 = vmatpush1.msra.mxu0 %v388
        %400 = vmatprep.subr.mxu0 0.0
        %401 = vmatpush1.msra.mxu0 %v389
        %402 = vmatprep.subr.mxu0 0.0
        %403 = vmatpush1.msra.mxu0 0.0
        %404 = vmatprep.subr.mxu0 0.0
        %405 = vmatpush1.msra.mxu0 0.0
        %406 = vmatprep.subr.mxu0 0.0
        %407 = vmatpush1.msra.mxu0 0.0
        %408 = vmatprep.subr.mxu0 0.0
        %409 = vmatpush1.msra.mxu0 0.0
        %410 = vmatprep.subr.mxu0 0.0
        %411 = vmatpush1.msra.mxu0 0.0
        %412 = vmatprep.subr.mxu0 0.0
        %413 = vmatpush1.msra.mxu0 0.0
        %414 = vmatprep.subr.mxu0 0.0
        %415 = vmatpush1.msra.mxu0 0.0
        %416 = vmatprep.subr.mxu0 0.0
        %417 = vmatpush1.msra.mxu0 0.0
        %418 = vmatprep.subr.mxu0 0.0
        %419 = vmatpush1.msra.mxu0 0.0
        %420 = vmatprep.subr.mxu0 0.0
        %421 = vmatpush1.msra.mxu0 0.0
        %422 = vmatprep.subr.mxu0 0.0
        %423 = vmatpush1.msra.mxu0 0.0
        %424 = vmatprep.subr.mxu0 0.0
        %425 = vmatpush1.msra.mxu0 0.0
        %426 = vmatprep.subr.mxu0 0.0
        %427 = vmatpush1.msra.mxu0 0.0
        %428 = vmatprep.subr.mxu0 0.0
        %429 = vmatpush1.msra.mxu0 0.0
        %430 = vmatprep.subr.mxu0 0.0
        %431 = vmatpush1.msra.mxu0 0.0
        %432 = vmatprep.subr.mxu0 0.0
        %433 = vmatpush1.msra.mxu0 0.0
        %434 = vmatprep.subr.mxu0 0.0
        %435 = vmatpush1.msra.mxu0 0.0
        %436 = vmatprep.subr.mxu0 0.0
        %437 = vmatpush1.msra.mxu0 0.0
        %438 = vmatprep.subr.mxu0 0.0
        %439 = vmatpush1.msra.mxu0 0.0
        %440 = vmatprep.subr.mxu0 0.0
        %441 = vmatpush1.msra.mxu0 0.0
        %442 = vmatprep.subr.mxu0 0.0
        %443 = vmatpush1.msra.mxu0 0.0
        %444 = vmatprep.subr.mxu0 0.0
        %445 = vmatpush1.msra.mxu0 0.0
        %446 = vmatprep.subr.mxu0 0.0
        %447 = vmatpush1.msra.mxu0 0.0
        %448 = vmatprep.subr.mxu0 0.0
        %449 = vmatpush1.msra.mxu0 0.0
        %450 = vmatprep.subr.mxu0 0.0
        %451 = vmatpush1.msra.mxu0 0.0
        %452 = vmatprep.subr.mxu0 0.0
        %453 = vmatpush1.msra.mxu0 0.0
        %454 = vmatprep.subr.mxu0 0.0
        %455 = vmatpush1.msra.mxu0 0.0
        %456 = vmatprep.subr.mxu0 0.0
        %457 = vmatpush1.msra.mxu0 0.0
        %458 = vmatprep.mubr.f32.mxu0 0.0
        %459 = vmatmul.mubr.f32.gmra.mrb[0].mxu0 %v392
        %v460 = vpop.f32.mrb[0].mxu0
        %v461 = vadd.f32 0.0, %v460
        %v462 = vpop.f32.mrb[0].mxu0
        %463 = vdwg.mxu0
        %v465 = vsel %vm390, %v379, 0
        %467 = vmatprep.subr.mxu0 0.0
        %468 = vmatpush1.msra.mxu0 %v382
        %469 = vmatprep.subr.mxu0 0.0
        %470 = vmatpush1.msra.mxu0 %v383
        %471 = vmatprep.subr.mxu0 0.0
        %472 = vmatpush1.msra.mxu0 %v384
        %473 = vmatprep.subr.mxu0 0.0
        %474 = vmatpush1.msra.mxu0 %v385
        %475 = vmatprep.subr.mxu0 0.0
        %476 = vmatpush1.msra.mxu0 0.0
        %477 = vmatprep.subr.mxu0 0.0
        %478 = vmatpush1.msra.mxu0 0.0
        %479 = vmatprep.subr.mxu0 0.0
        %480 = vmatpush1.msra.mxu0 0.0
        %481 = vmatprep.subr.mxu0 0.0
        %482 = vmatpush1.msra.mxu0 0.0
        %483 = vmatprep.subr.mxu0 0.0
        %484 = vmatpush1.msra.mxu0 0.0
        %485 = vmatprep.subr.mxu0 0.0
        %486 = vmatpush1.msra.mxu0 0.0
        %487 = vmatprep.subr.mxu0 0.0
        %488 = vmatpush1.msra.mxu0 0.0
        %489 = vmatprep.subr.mxu0 0.0
        %490 = vmatpush1.msra.mxu0 0.0
        %491 = vmatprep.subr.mxu0 0.0
        %492 = vmatpush1.msra.mxu0 0.0
        %493 = vmatprep.subr.mxu0 0.0
        %494 = vmatpush1.msra.mxu0 0.0
        %495 = vmatprep.subr.mxu0 0.0
        %496 = vmatpush1.msra.mxu0 0.0
        %497 = vmatprep.subr.mxu0 0.0
        %498 = vmatpush1.msra.mxu0 0.0
        %499 = vmatprep.subr.mxu0 0.0
        %500 = vmatpush1.msra.mxu0 0.0
        %501 = vmatprep.subr.mxu0 0.0
        %502 = vmatpush1.msra.mxu0 0.0
        %503 = vmatprep.subr.mxu0 0.0
        %504 = vmatpush1.msra.mxu0 0.0
        %505 = vmatprep.subr.mxu0 0.0
        %506 = vmatpush1.msra.mxu0 0.0
        %507 = vmatprep.subr.mxu0 0.0
        %508 = vmatpush1.msra.mxu0 0.0
        %509 = vmatprep.subr.mxu0 0.0
        %510 = vmatpush1.msra.mxu0 0.0
        %511 = vmatprep.subr.mxu0 0.0
        %512 = vmatpush1.msra.mxu0 0.0
        %513 = vmatprep.subr.mxu0 0.0
        %514 = vmatpush1.msra.mxu0 0.0
        %515 = vmatprep.subr.mxu0 0.0
        %516 = vmatpush1.msra.mxu0 0.0
        %517 = vmatprep.subr.mxu0 0.0
        %518 = vmatpush1.msra.mxu0 0.0
        %519 = vmatprep.subr.mxu0 0.0
        %520 = vmatpush1.msra.mxu0 0.0
        %521 = vmatprep.subr.mxu0 0.0
        %522 = vmatpush1.msra.mxu0 0.0
        %523 = vmatprep.subr.mxu0 0.0
        %524 = vmatpush1.msra.mxu0 0.0
        %525 = vmatprep.subr.mxu0 0.0
        %526 = vmatpush1.msra.mxu0 0.0
        %527 = vmatprep.subr.mxu0 0.0
        %528 = vmatpush1.msra.mxu0 0.0
        %529 = vmatprep.subr.mxu0 0.0
        %530 = vmatpush1.msra.mxu0 0.0
        %531 = vmatprep.mubr.f32.mxu0 0.0
        %532 = vmatmul.mubr.f32.gmra.mrb[0].mxu0 %v465
        %v533 = vpop.f32.mrb[0].mxu0
        %v534 = vadd.f32 %v461, %v533
        %v535 = vpop.f32.mrb[0].mxu0
        %536 = vdwg.mxu0
        %v537 = vld [vmem:[%s4] sm:$0x1]
        %v539 = vlaneseq
        %v540 = vshrl.u32 %v539, 7
        %v541 = vsub.s32 0, %v540
        %v542 = vrot.slane %v537, %v541
        %v544 = vadd.f32 %v534, %v542
        %v545 = vxor.u32 %v544, 2147483648
        %v546 = vmul.f32 %v545, 1.442695
        %v547 = vpow.pop %v546
        %v548 = vadd.f32 %v547, 1.0
        %v549 = vrcp.pop %v548
        %v550 = vmul.f32 1.0, %v549
        %v551 = vtanh.pop %v544
        %553 = vrot.lane.b32.xlu0 %v381, 32
        %v554 = vpop.permute.xlu0 %553
        %v556 = vmul.f32 %v550, %v554
        %558 = vrot.lane.b32.xlu0 %v551, 64
        %v559 = vpop.permute.xlu0 %558
        %v561 = vmul.f32 %v550, %v559
        %563 = vrot.lane.b32.xlu0 %v561, 32
        %v564 = vpop.permute.xlu0 %563
        %v566 = vadd.f32 %v556, %v564
        %v567 = vtanh.pop %v566
        %569 = vrot.lane.b32.xlu0 %v567, 64
        %v570 = vpop.permute.xlu0 %569
        %v572 = vmul.f32 %v550, %v570
        %574 = vrot.lane.b32.xlu0 %v572, 32
        %v575 = vpop.permute.xlu0 %574
        %577 = vst.msk [vmem:[#allocation12] sm:$0xff] %vm390, %v575
        %579 = vrot.lane.b32.xlu0 %v566, 96
        %v580 = vpop.permute.xlu0 %579
        %582 = vst.msk [vmem:[#allocation14] sm:$0xff] %vm390, %v580
        %583 = vst.msk [vmem:[%s324] sm:$0xff] %vm390, %v575
        %s584 = sand.u32 %s165, 1
        %s585 = scalar_lea.sflag [#allocation7], %s584
        %s586 = sand.u32 %s165, 1
        %s587 = smul.addr %s586, 8
        %s588 = scalar_lea.vmem [#allocation11], %s587
        // Predicated region
        $region61: #{tpu_custom_call.1} parent=43 // pred_check
          %p589 = pneg %p175
        $region62: #{tpu_custom_call.1} parent=43 // pred_check_branch
          %591 = sbr.rel (%p589) target = $region64
        $region63: #{tpu_custom_call.1} parent=43 // pred_region
          %s593 = ssub.s32 128, 128
          %594 = vsyncadd %s585, %s593
          %s595 = smul.addr %s31, 128
          %s596 = scalar_lea.hbm %s7, %s595
          %s598 = sshll.u32 %s588, 4
          %s599 = int_to_ptr.vmem [resolvable:$true] %s598
          %601 = dma.vmem_to_hbm [thread:$0]  %s599, 128, %s596, %s585
        $region64: #{tpu_custom_call.1} parent=43 // pred_fallthru
          _
        // Predicated region
        $region65: #{tpu_custom_call.1} parent=43 // pred_check
          %p602 = pneg %p196
        $region66: #{tpu_custom_call.1} parent=43 // pred_check_branch
          %604 = sbr.rel (%p602) target = $region68
        $region67: #{tpu_custom_call.1} parent=43 // pred_region
          %s606 = ssub.s32 128, 128
          %607 = vsyncadd [#allocation13], %s606
          %s609 = sshll.u32 [#allocation12], 4
          %s610 = int_to_ptr.vmem [resolvable:$true] %s609
          %612 = dma.vmem_to_hbm [thread:$0]  %s610, 128, %s8, [#allocation13]
        $region68: #{tpu_custom_call.1} parent=43 // pred_fallthru
          _
        // Predicated region
        $region69: #{tpu_custom_call.1} parent=43 // pred_check
          %p613 = pneg %p217
        $region70: #{tpu_custom_call.1} parent=43 // pred_check_branch
          %615 = sbr.rel (%p613) target = $region72
        $region71: #{tpu_custom_call.1} parent=43 // pred_region
          %s617 = ssub.s32 128, 128
          %618 = vsyncadd [#allocation13], %s617
          %s620 = sshll.u32 [#allocation14], 4
          %s621 = int_to_ptr.vmem [resolvable:$true] %s620
          %623 = dma.vmem_to_hbm [thread:$0]  %s621, 128, %s9, [#allocation13]
        $region72: #{tpu_custom_call.1} parent=43 // pred_fallthru
          _
        // Predicated region
        $region73: #{tpu_custom_call.1} parent=43 // pred_check
          %p624 = pneg %p196
        $region74: #{tpu_custom_call.1} parent=43 // pred_check_branch
          %626 = sbr.rel (%p624) target = $region76
        $region75: #{tpu_custom_call.1} parent=43 // pred_region
          %627 = dma.done [#allocation13], 128
        $region76: #{tpu_custom_call.1} parent=43 // pred_fallthru
          _
        // Predicated region
        $region77: #{tpu_custom_call.1} parent=43 // pred_check
          %p628 = pneg %p217
        $region78: #{tpu_custom_call.1} parent=43 // pred_check_branch
          %630 = sbr.rel (%p628) target = $region80
        $region79: #{tpu_custom_call.1} parent=43 // pred_region
          %631 = dma.done [#allocation13], 128
        $region80: #{tpu_custom_call.1} parent=43 // pred_fallthru
          _
      $region44: #{tpu_custom_call.1} parent=5 // pred_fallthru
        _
      %p632 = scmp.le.s32.totalorder 2, %s26
      // Predicated region
      $region81: #{tpu_custom_call.1} parent=5 // pred_check
        %p633 = pneg %p632
      $region82: #{tpu_custom_call.1} parent=5 // pred_check_branch
        %635 = sbr.rel (%p633) target = $region84
      $region83: #{tpu_custom_call.1} parent=5 // pred_region
        %s636 = ssub.s32 %s26, 2
        // Predicated region
        $region85: #{tpu_custom_call.1} parent=83 // pred_check
          %p637 = pneg %p181
        $region86: #{tpu_custom_call.1} parent=83 // pred_check_branch
          %639 = sbr.rel (%p637) target = $region88
        $region87: #{tpu_custom_call.1} parent=83 // pred_region
          %s640 = sand.u32 %s166, 1
          %s641 = scalar_lea.sflag [#allocation7], %s640
          %s642 = sand.u32 %s166, 1
          %s643 = smul.addr %s642, 8
          %s644 = scalar_lea.vmem [#allocation11], %s643
          %645 = dma.done %s641, 128
        $region88: #{tpu_custom_call.1} parent=83 // pred_fallthru
          _
      $region84: #{tpu_custom_call.1} parent=5 // pred_fallthru
        _
    $region6: #{tpu_custom_call.1} parent=1 // loop_footer
      %s30 = sadd.s32 1, %s26
    $region7: #{tpu_custom_call.1} parent=1 // loop_footer_branch
      %25 = sbr.rel target = $region3
    $region8: #{tpu_custom_call.1} parent=1 // loop_exit
      _
    %646 = vsyncpa [#allocation6], 1
    %s647 = scalar_lea.sflag [#allocation6], 1
    %648 = vsyncpa %s647, 1
    %649 = vsyncpa [#allocation9], 1
    %650 = vsyncpa [#allocation7], 1
    %s651 = scalar_lea.sflag [#allocation7], 1
    %652 = vsyncpa %s651, 1
    %653 = vsyncpa [#allocation13], 1

</llo_original>
